<compile_context>
chip_gen: v7x
topology: tpu7x:2x2x1
jax: 0.10.0
libtpu: 0.0.40
codegen_flags: <defaults>
</compile_context>

<pallas_src>
import jax
import jax.numpy as jnp
from jax.experimental import pallas as pl
from jax.experimental.pallas import tpu as pltpu

SMOOTH = 1.0  # DiceLoss.__init__: self.smooth = 1 (no learnable parameters)


def _dice_loss_jax(inp, target):
    """Pure-JAX reference / fallback (matches the PyTorch forward)."""
    axes = tuple(range(1, inp.ndim))
    x = inp.astype(jnp.float32)
    y = target.astype(jnp.float32)
    intersect = jnp.sum(x * y, axis=axes)
    union = jnp.sum(x * x, axis=axes) + jnp.sum(y * y, axis=axes)
    loss = 1.0 - (2.0 * intersect + SMOOTH) / (union + SMOOTH)
    return jnp.mean(loss)


def _tpu_vmem_capacity_bytes():
    try:
        info = pltpu.get_tpu_info()
        cap = int(getattr(info, "vmem_capacity_bytes"))
        if cap > 0:
            return cap
    except Exception:
        pass
    return 128 * 1024 * 1024  # conservative v5e/v6e-class default


def _num_tensorcores():
    """Best-effort TensorCore count (v7x has 2 per chip); defaults to 1."""
    try:
        info = pltpu.get_tpu_info()
        for attr in ("num_cores", "tensorcore_count", "num_tensorcores",
                     "core_count"):
            v = getattr(info, attr, None)
            if isinstance(v, int) and v > 0:
                return v
    except Exception:
        pass
    return 1


def _make_dice_kernel(num_tiles, nt_per_split, t_rows, num_rows,
                      needs_row_mask):
    """Kernel over grid (n_split, nt_per_split); blocks are (B, t_rows, lane)."""

    def kernel(x_ref, y_ref, o_xy_ref, o_un_ref, acc_xy_ref, acc_un_ref):
        i = pl.program_id(0)          # split index ("parallel")
        k = pl.program_id(1)          # tile index within the split (reduction)
        nk = pl.num_programs(1)

        @pl.when(k == 0)
        def _init():
            acc_xy_ref[...] = jnp.zeros_like(acc_xy_ref)
            acc_un_ref[...] = jnp.zeros_like(acc_un_ref)

        def _accumulate(masked):
            def body():
                x = x_ref[...].astype(jnp.float32)
                y = y_ref[...].astype(jnp.float32)
                if masked:
                    # Zero rows past the real extent (only the tail tile).
                    virt = i * nt_per_split + k
                    row_ids = virt * t_rows + jax.lax.broadcasted_iota(
                        jnp.int32, x_ref.shape, 1)
                    keep = row_ids < num_rows
                    x = jnp.where(keep, x, 0.0)
                    y = jnp.where(keep, y, 0.0)
                # Sublane (row-axis) reduce per tile -> only a small (B, lane)
                # f32 accumulator is read-modify-written each step.
                acc_xy_ref[...] += jnp.sum(x * y, axis=1)
                acc_un_ref[...] += jnp.sum(x * x + y * y, axis=1)
            return body

        if needs_row_mask:
            virt = i * nt_per_split + k
            is_tail = virt == num_tiles - 1
            pl.when(jnp.logical_not(is_tail))(_accumulate(False))
            pl.when(is_tail)(_accumulate(True))
        else:
            _accumulate(False)()

        @pl.when(k == nk - 1)
        def _finalize():
            o_xy_ref[...] = jnp.sum(acc_xy_ref[...], axis=1)[None, :, None]
            o_un_ref[...] = jnp.sum(acc_un_ref[...], axis=1)[None, :, None]

    return kernel


def dice_loss(inp, target):
    """Pallas equivalent of DiceLoss.forward. Returns a scalar f32."""
    assert inp.shape == target.shape
    b = inp.shape[0]
    d = 1
    for s in inp.shape[1:]:
        d *= s

    # Pick a lane width that divides D so no padding (extra HBM pass) is needed.
    lane = None
    for cand in (512, 256, 128):
        if d % cand == 0:
            lane = cand
            break
    if lane is None:
        # D not a multiple of 128: rare for C*H*W; let XLA fuse the reduction.
        # TODO(synk): add a lane-masked 2D tiling path for non-128-divisible D.
        return _dice_loss_jax(inp, target)

    rows = d // lane
    itemsize = jnp.dtype(inp.dtype).itemsize
    # Sublane packing granularity: f32 -> 8, bf16 -> 16, int8/fp8 -> 32.
    g = max(8, 32 // itemsize)

    # Generation-aware VMEM budgets.
    vmem_cap = _tpu_vmem_capacity_bytes()
    if vmem_cap >= 96 * 1024 * 1024:            # v5e / v6e class (128 MiB)
        budget_bytes = 8 * 1024 * 1024          # per input, per buffer
        vmem_limit = 64 * 1024 * 1024
    else:                                       # v7x class (64 MiB per TC)
        budget_bytes = 4 * 1024 * 1024
        vmem_limit = 48 * 1024 * 1024

    bytes_per_row = b * lane * itemsize
    # 2 inputs x 2 buffers of the tile + accumulators/outputs must fit.
    per_buf_cap = min(budget_bytes, (vmem_limit - 1024 * 1024) // 4)
    feas_rows = per_buf_cap // bytes_per_row

    if feas_rows < 1:
        # TODO(synk): tile over the batch axis for very large B instead of
        # falling back to the XLA-fused reduction.
        return _dice_loss_jax(inp, target)

    needs_row_mask = False
    if rows <= feas_rows:
        # Whole row extent in a single tile (block == full dim is always legal).
        t_rows = rows
    else:
        if feas_rows < 8:
            # Cannot form a legal (8, 128)-aligned tile within VMEM.
            return _dice_loss_jax(inp, target)
        max_t_rows = feas_rows
        # Prefer a divisor of `rows` (no tail mask), aligned to g (then 8).
        t_rows = 0
        for align in (g, 8):
            r = (max_t_rows // align) * align
            while r >= align:
                if rows % r == 0:
                    break
                r -= align
            else:
                r = 0
            if r >= max(align, max_t_rows // 4):
                t_rows = r
                break
        if t_rows == 0:
            t_rows = max(g, (max_t_rows // g) * g)
            needs_row_mask = (rows % t_rows != 0)

    num_tiles = pl.cdiv(rows, t_rows)

    # Split across TensorCores only when there are >= 2 of them (v7x) and the
    # tile count splits evenly (no overhang / clamped-DMA machinery needed).
    cores = _num_tensorcores()
    n_split = 2 if (cores >= 2 and num_tiles >= 2 and num_tiles % 2 == 0) else 1
    nt_per_split = num_tiles // n_split

    # Free, contiguous reshape; keep the original dtype (kernel upcasts per tile).
    x3 = inp.reshape(b, rows, lane)
    y3 = target.reshape(b, rows, lane)

    def in_map(i, k):
        return (0, i * nt_per_split + k, 0)

    def out_map(i, k):
        return (i, 0, 0)

    kernel = _make_dice_kernel(num_tiles, nt_per_split, t_rows, rows,
                               needs_row_mask)

    part_xy, part_un = pl.pallas_call(
        kernel,
        out_shape=(jax.ShapeDtypeStruct((n_split, b, 1), jnp.float32),
                   jax.ShapeDtypeStruct((n_split, b, 1), jnp.float32)),
        grid_spec=pltpu.PrefetchScalarGridSpec(
            num_scalar_prefetch=0,
            grid=(n_split, nt_per_split),
            in_specs=[
                pl.BlockSpec((b, t_rows, lane), in_map),
                pl.BlockSpec((b, t_rows, lane), in_map),
            ],
            out_specs=[
                pl.BlockSpec((1, b, 1), out_map),
                pl.BlockSpec((1, b, 1), out_map),
            ],
            scratch_shapes=[
                pltpu.VMEM((b, lane), jnp.float32),  # sum(x*y) per-lane partials
                pltpu.VMEM((b, lane), jnp.float32),  # sum(x^2+y^2) partials
            ],
        ),
        compiler_params=pltpu.CompilerParams(
            dimension_semantics=("parallel", "arbitrary"),
            vmem_limit_bytes=vmem_limit,
        ),
    )(x3, y3)

    # Tiny JAX epilogue: combine per-split partials and form the dice loss.
    sxy = jnp.sum(part_xy[:, :, 0], axis=0)      # (B,)
    sun = jnp.sum(part_un[:, :, 0], axis=0)      # (B,)
    loss = 1.0 - (2.0 * sxy + SMOOTH) / (sun + SMOOTH)
    return jnp.mean(loss)


if __name__ == "__main__":
    key = jax.random.PRNGKey(0)
    k1, k2 = jax.random.split(key)
    # NCHW, small shapes: batch=2, channels=4, spatial=16x16
    x = jax.random.uniform(k1, (2, 4, 16, 16), dtype=jnp.float32)            # probs
    t = (jax.random.uniform(k2, (2, 4, 16, 16)) > 0.5).astype(jnp.float32)   # mask

    out = dice_loss(x, t)
    jax.block_until_ready(out)

    ref = _dice_loss_jax(x, t)
    assert jnp.allclose(out, ref, rtol=1e-5, atol=1e-5), (out, ref)
    print("KERNEL_OK")
</pallas_src>

<mosaic_0001>
module attributes {stable_mosaic.version = 11 : i64} {
  func.func @kernel(%arg0: i32, %arg1: i32, %arg2: memref<2x2x512xf32, #tpu.memory_space<vmem>>, %arg3: memref<2x2x512xf32, #tpu.memory_space<vmem>>, %arg4: memref<1x2x1xf32, #tpu.memory_space<vmem>>, %arg5: memref<1x2x1xf32, #tpu.memory_space<vmem>>, %arg6: memref<2x512xf32, #tpu.memory_space<vmem>>, %arg7: memref<2x512xf32, #tpu.memory_space<vmem>>) attributes {dimension_semantics = [#tpu.dimension_semantics<parallel>, #tpu.dimension_semantics<arbitrary>], iteration_bounds = array<i64: 1, 1>, scalar_prefetch = 0 : i64, scratch_operands = 2 : i64, tpu.core_type = #tpu.core_type<tc>, window_params = [{transform_indices = @transform_0, window_bounds = array<i64: 2, 2, 512>}, {transform_indices = @transform_1, window_bounds = array<i64: 2, 2, 512>}, {transform_indices = @transform_2, window_bounds = array<i64: 1, 2, 1>}, {transform_indices = @transform_3, window_bounds = array<i64: 1, 2, 1>}]} {
    %c0_i32 = arith.constant 0 : i32
    %0 = arith.cmpi eq, %arg1, %c0_i32 : i32
    %1 = arith.extui %0 : i1 to i32
    %c0_i32_0 = arith.constant 0 : i32
    %2 = arith.cmpi ne, %1, %c0_i32_0 : i32
    scf.if %2 {
      %cst_17 = arith.constant 0.000000e+00 : f32
      %20 = vector.broadcast %cst_17 : f32 to vector<2x512xf32>
      %c0_18 = arith.constant 0 : index
      %c0_19 = arith.constant 0 : index
      %21 = vector.load %arg6[%c0_18, %c0_19] : memref<2x512xf32, #tpu.memory_space<vmem>>, vector<2x512xf32>
      tpu.vector_store %arg6[%c0_18, %c0_19], %20 {strides = array<i32>} : memref<2x512xf32, #tpu.memory_space<vmem>>, vector<2x512xf32>,
      %cst_20 = arith.constant 0.000000e+00 : f32
      %22 = vector.broadcast %cst_20 : f32 to vector<2x512xf32>
      %c0_21 = arith.constant 0 : index
      %c0_22 = arith.constant 0 : index
      %23 = vector.load %arg7[%c0_21, %c0_22] : memref<2x512xf32, #tpu.memory_space<vmem>>, vector<2x512xf32>
      tpu.vector_store %arg7[%c0_21, %c0_22], %22 {strides = array<i32>} : memref<2x512xf32, #tpu.memory_space<vmem>>, vector<2x512xf32>,
    } else {
    }
    %c0 = arith.constant 0 : index
    %c0_1 = arith.constant 0 : index
    %c0_2 = arith.constant 0 : index
    %3 = vector.load %arg2[%c0, %c0_1, %c0_2] : memref<2x2x512xf32, #tpu.memory_space<vmem>>, vector<2x2x512xf32>
    %c0_3 = arith.constant 0 : index
    %c0_4 = arith.constant 0 : index
    %c0_5 = arith.constant 0 : index
    %4 = vector.load %arg3[%c0_3, %c0_4, %c0_5] : memref<2x2x512xf32, #tpu.memory_space<vmem>>, vector<2x2x512xf32>
    %c0_6 = arith.constant 0 : index
    %c0_7 = arith.constant 0 : index
    %5 = vector.load %arg6[%c0_6, %c0_7] : memref<2x512xf32, #tpu.memory_space<vmem>>, vector<2x512xf32>
    %6 = arith.mulf %3, %4 : vector<2x2x512xf32>
    %cst = arith.constant dense<0.000000e+00> : vector<2x512xf32>
    %7 = vector.multi_reduction <add>, %6, %cst [1] : vector<2x2x512xf32> to vector<2x512xf32>
    %8 = arith.addf %5, %7 : vector<2x512xf32>
    %c0_8 = arith.constant 0 : index
    %c0_9 = arith.constant 0 : index
    %9 = vector.load %arg6[%c0_8, %c0_9] : memref<2x512xf32, #tpu.memory_space<vmem>>, vector<2x512xf32>
    tpu.vector_store %arg6[%c0_8, %c0_9], %8 {strides = array<i32>} : memref<2x512xf32, #tpu.memory_space<vmem>>, vector<2x512xf32>,
    %c0_10 = arith.constant 0 : index
    %c0_11 = arith.constant 0 : index
    %10 = vector.load %arg7[%c0_10, %c0_11] : memref<2x512xf32, #tpu.memory_space<vmem>>, vector<2x512xf32>
    %11 = arith.mulf %3, %3 : vector<2x2x512xf32>
    %12 = arith.mulf %4, %4 : vector<2x2x512xf32>
    %13 = arith.addf %11, %12 : vector<2x2x512xf32>
    %cst_12 = arith.constant dense<0.000000e+00> : vector<2x512xf32>
    %14 = vector.multi_reduction <add>, %13, %cst_12 [1] : vector<2x2x512xf32> to vector<2x512xf32>
    %15 = arith.addf %10, %14 : vector<2x512xf32>
    %c0_13 = arith.constant 0 : index
    %c0_14 = arith.constant 0 : index
    %16 = vector.load %arg7[%c0_13, %c0_14] : memref<2x512xf32, #tpu.memory_space<vmem>>, vector<2x512xf32>
    tpu.vector_store %arg7[%c0_13, %c0_14], %15 {strides = array<i32>} : memref<2x512xf32, #tpu.memory_space<vmem>>, vector<2x512xf32>,
    %c0_i32_15 = arith.constant 0 : i32
    %17 = arith.cmpi eq, %arg1, %c0_i32_15 : i32
    %18 = arith.extui %17 : i1 to i32
    %c0_i32_16 = arith.constant 0 : i32
    %19 = arith.cmpi ne, %18, %c0_i32_16 : i32
    scf.if %19 {
      %c0_17 = arith.constant 0 : index
      %c0_18 = arith.constant 0 : index
      %20 = vector.load %arg6[%c0_17, %c0_18] : memref<2x512xf32, #tpu.memory_space<vmem>>, vector<2x512xf32>
      %cst_19 = arith.constant dense<0.000000e+00> : vector<2xf32>
      %21 = vector.multi_reduction <add>, %20, %cst_19 [1] : vector<2x512xf32> to vector<2xf32>
      %22 = vector.shape_cast %21 : vector<2xf32> to vector<1x2x1xf32>
      %c0_20 = arith.constant 0 : index
      %c0_21 = arith.constant 0 : index
      %c0_22 = arith.constant 0 : index
      %23 = vector.load %arg4[%c0_20, %c0_21, %c0_22] : memref<1x2x1xf32, #tpu.memory_space<vmem>>, vector<1x2x1xf32>
      tpu.vector_store %arg4[%c0_20, %c0_21, %c0_22], %22 {strides = array<i32>} : memref<1x2x1xf32, #tpu.memory_space<vmem>>, vector<1x2x1xf32>,
      %c0_23 = arith.constant 0 : index
      %c0_24 = arith.constant 0 : index
      %24 = vector.load %arg7[%c0_23, %c0_24] : memref<2x512xf32, #tpu.memory_space<vmem>>, vector<2x512xf32>
      %cst_25 = arith.constant dense<0.000000e+00> : vector<2xf32>
      %25 = vector.multi_reduction <add>, %24, %cst_25 [1] : vector<2x512xf32> to vector<2xf32>
      %26 = vector.shape_cast %25 : vector<2xf32> to vector<1x2x1xf32>
      %c0_26 = arith.constant 0 : index
      %c0_27 = arith.constant 0 : index
      %c0_28 = arith.constant 0 : index
      %27 = vector.load %arg5[%c0_26, %c0_27, %c0_28] : memref<1x2x1xf32, #tpu.memory_space<vmem>>, vector<1x2x1xf32>
      tpu.vector_store %arg5[%c0_26, %c0_27, %c0_28], %26 {strides = array<i32>} : memref<1x2x1xf32, #tpu.memory_space<vmem>>, vector<1x2x1xf32>,
    } else {
    }
    return
  }
  func.func @transform_0(%arg0: i32, %arg1: i32) -> (i32, i32, i32) {
    %c1_i32 = arith.constant 1 : i32
    %0 = arith.muli %arg0, %c1_i32 : i32
    %1 = arith.addi %0, %arg1 : i32
    %c0_i32 = arith.constant 0 : i32
    %c0_i32_0 = arith.constant 0 : i32
    %c0_i32_1 = arith.constant 0 : i32
    return %c0_i32, %1, %c0_i32_0 : i32, i32, i32
  }
  func.func @transform_1(%arg0: i32, %arg1: i32) -> (i32, i32, i32) {
    %c1_i32 = arith.constant 1 : i32
    %0 = arith.muli %arg0, %c1_i32 : i32
    %1 = arith.addi %0, %arg1 : i32
    %c0_i32 = arith.constant 0 : i32
    %c0_i32_0 = arith.constant 0 : i32
    %c0_i32_1 = arith.constant 0 : i32
    return %c0_i32, %1, %c0_i32_0 : i32, i32, i32
  }
  func.func @transform_2(%arg0: i32, %arg1: i32) -> (i32, i32, i32) {
    %c0_i32 = arith.constant 0 : i32
    %c0_i32_0 = arith.constant 0 : i32
    %c0_i32_1 = arith.constant 0 : i32
    return %arg0, %c0_i32, %c0_i32_0 : i32, i32, i32
  }
  func.func @transform_3(%arg0: i32, %arg1: i32) -> (i32, i32, i32) {
    %c0_i32 = arith.constant 0 : i32
    %c0_i32_0 = arith.constant 0 : i32
    %c0_i32_1 = arith.constant 0 : i32
    return %arg0, %c0_i32, %c0_i32_0 : i32, i32, i32
  }
}

</mosaic_0001>

<llo_original>
// kernel: tpu_custom_call.1
$region0: #{tpu_custom_call.1}
  #allocation0 [shape = 'u32[]', space=smem, size = 0x4, offset = 0x4, fixed_abs, tag = 'smem constant byte address 0x4 - core index']
  #allocation1 [shape = 'u32[144,128]{1,0:T(1,128)}', space=vmem, size = 0x12000, scoped, tag = 'internal scratch']
  #allocation2 [shape = 'f32[2,512]{1,0:T(2,128)}', space=vmem, size = 0x1000, scoped, tag = 'scratch operand']
  #allocation3 [shape = 'f32[2,512]{1,0:T(2,128)}', space=vmem, size = 0x1000, scoped, tag = 'scratch operand']
  %s0 = inlined_call_operand.hbm [shape: f32[2,2,512], index: 0, kind: input, shape index: {}]
  %s1 = inlined_call_operand.hbm [shape: f32[2,2,512], index: 1, kind: input, shape index: {}]
  %s2 = inlined_call_operand.hbm [shape: f32[1,2,1], index: 2, kind: output, shape index: {0}]
  %s3 = inlined_call_operand.hbm [shape: f32[1,2,1], index: 3, kind: output, shape index: {1}]
  %4 = xla_tuple %s2, %s3
  %s5 = sld [smem:[#allocation0]]
  $region42: #{tpu_custom_call.1} parent=0
    _
  %s7 = ssub.s32 1, %s5
  %s8 = scalar_select 0, %s7, %s5
  $region1: #{tpu_custom_call.1} parent=0
    #allocation4 [shape = 'u8[8192]{0}', space=vmem, size = 0x2000, scoped, tag = 'input window, operand 0, single buffered']
    #allocation5 [shape = 's32[1]{0}', space=sflag, size = 0x4, scoped, tag = 'scoped memory for tpu_custom_call.1']
    #allocation6 [shape = 's32[1]{0}', space=sflag, size = 0x4, scoped, tag = 'scoped memory for tpu_custom_call.1']
    #allocation7 [shape = 'u8[8192]{0}', space=vmem, size = 0x2000, scoped, tag = 'input window, operand 1, single buffered']
    #allocation8 [shape = 's32[1]{0}', space=sflag, size = 0x4, scoped, tag = 'scoped memory for tpu_custom_call.1']
    #allocation9 [shape = 'u8[1024]{0}', space=vmem, size = 0x400, scoped, tag = 'output window, operand 0, single buffered']
    #allocation10 [shape = 'u8[1024]{0}', space=vmem, size = 0x400, scoped, tag = 'output window, operand 1, single buffered']
    #allocation11 [shape = 's32[1]{0}', space=sflag, size = 0x4, scoped, tag = 'scoped memory for tpu_custom_call.1']
    %9 = vsyncpa [#allocation5], 0
    %10 = vsyncpa [#allocation8], 0
    %11 = vsyncpa [#allocation6], 0
    %12 = vsyncpa [#allocation11], 0
    // Predicated region
    $region2: #{tpu_custom_call.1} parent=1 // pred_check
      _
    $region3: #{tpu_custom_call.1} parent=1 // pred_check_branch
      %14 = sbr.rel (0) target = $region5
    $region4: #{tpu_custom_call.1} parent=1 // pred_region
      %s15 = sadd.s32 0, 0
      %s17 = ssub.s32 256, 256
      %18 = vsyncadd [#allocation5], %s17
      %s19 = smul.addr %s15, 4
      %s20 = smul.addr %s19, 32
      %s21 = scalar_lea.hbm %s0, %s20
      %s22 = sshll.u32 [#allocation4], 4
      %s23 = int_to_ptr.vmem [resolvable:$true] %s22
      %28 = dma.hbm_to_vmem [thread:$0]  %s21, 256, %s23, [#allocation5], 128, 128, 8
    $region5: #{tpu_custom_call.1} parent=1 // pred_fallthru
      _
    // Predicated region
    $region6: #{tpu_custom_call.1} parent=1 // pred_check
      _
    $region7: #{tpu_custom_call.1} parent=1 // pred_check_branch
      %30 = sbr.rel (0) target = $region9
    $region8: #{tpu_custom_call.1} parent=1 // pred_region
      %s31 = sadd.s32 0, 0
      %s33 = ssub.s32 256, 256
      %34 = vsyncadd [#allocation8], %s33
      %s35 = smul.addr %s31, 4
      %s36 = smul.addr %s35, 32
      %s37 = scalar_lea.hbm %s1, %s36
      %s38 = sshll.u32 [#allocation7], 4
      %s39 = int_to_ptr.vmem [resolvable:$true] %s38
      %44 = dma.hbm_to_vmem [thread:$0]  %s37, 256, %s39, [#allocation8], 128, 128, 8
    $region9: #{tpu_custom_call.1} parent=1 // pred_fallthru
      _
    // Predicated region
    $region10: #{tpu_custom_call.1} parent=1 // pred_check
      _
    $region11: #{tpu_custom_call.1} parent=1 // pred_check_branch
      %46 = sbr.rel (0) target = $region13
    $region12: #{tpu_custom_call.1} parent=1 // pred_region
      %47 = dma.done [#allocation5], 256
    $region13: #{tpu_custom_call.1} parent=1 // pred_fallthru
      _
    // Predicated region
    $region14: #{tpu_custom_call.1} parent=1 // pred_check
      _
    $region15: #{tpu_custom_call.1} parent=1 // pred_check_branch
      %49 = sbr.rel (0) target = $region17
    $region16: #{tpu_custom_call.1} parent=1 // pred_region
      %50 = dma.done [#allocation8], 256
    $region17: #{tpu_custom_call.1} parent=1 // pred_fallthru
      _
    %s51 = sadd.s32 0, 0
    %s52 = sadd.s32 0, 0
    %p53 = scmp.eq.s32.totalorder 0, 0
    // Predicated region
    $region18: #{tpu_custom_call.1} parent=1 // pred_check
      %p54 = pneg %p53
    $region19: #{tpu_custom_call.1} parent=1 // pred_check_branch
      %56 = sbr.rel (%p54) target = $region21
    $region20: #{tpu_custom_call.1} parent=1 // pred_region
      %57 = vst [vmem:[#allocation2] sm:$0xff] 0.0
      %58 = vst [vmem:[#allocation3] sm:$0xff] 0.0
    $region21: #{tpu_custom_call.1} parent=1 // pred_fallthru
      _
    %v59 = vld [vmem:[#allocation4] sm:$0xff]
    %v60 = vld [vmem:[#allocation4 + $0x8] sm:$0xff]
    %v61 = vld [vmem:[#allocation7] sm:$0xff]
    %v62 = vld [vmem:[#allocation7 + $0x8] sm:$0xff]
    %v63 = vld [vmem:[#allocation2] sm:$0xff]
    %v64 = vmul.f32 %v59, %v61
    %v65 = vmul.f32 %v60, %v62
    %v68 = vcombine.high %v64, %v64
    %v70 = vunpack.c.l.s4 1983009808
    %v71 = vunpack.c.0.s8 %v70
    %v72 = vlaneseq
    %v73 = vshrl.u32 %v72, 7
    %v74 = vsub.s32 %v71, %v73
    %v75 = vrot.slane %v64, %v74
    %v77 = vunpack.c.l.s4 1983009808
    %v78 = vunpack.c.0.s8 %v77
    %v79 = vlaneseq
    %v80 = vshrl.u32 %v79, 7
    %v81 = vsub.s32 %v78, %v80
    %v82 = vrot.slane %v68, %v81
    %v83 = vcombine.high %v75, %v75
    %v84 = vcombine.high %v82, %v82
    %v85 = vcombine.high %v65, %v65
    %v87 = vunpack.c.l.s4 1983009808
    %v88 = vunpack.c.0.s8 %v87
    %v89 = vlaneseq
    %v90 = vshrl.u32 %v89, 7
    %v91 = vsub.s32 %v88, %v90
    %v92 = vrot.slane %v65, %v91
    %v94 = vunpack.c.l.s4 1983009808
    %v95 = vunpack.c.0.s8 %v94
    %v96 = vlaneseq
    %v97 = vshrl.u32 %v96, 7
    %v98 = vsub.s32 %v95, %v97
    %v99 = vrot.slane %v85, %v98
    %v100 = vcombine.high %v92, %v92
    %v101 = vcombine.high %v99, %v99
    %vm110 = vcmask 1041408
    %v111 = vsel %vm110, %v75, 0.0
    %v112 = vrot.slane %v111, 4
    %v113 = vadd.f32 %v111, %v112
    %v114 = vrot.slane %v113, 2
    %v115 = vadd.f32 %v113, %v114
    %v116 = vrot.slane %v115, 1
    %v117 = vadd.f32 %v115, %v116
    %v118 = vsel %vm110, %v83, 0.0
    %v119 = vrot.slane %v118, 4
    %v120 = vadd.f32 %v118, %v119
    %v121 = vrot.slane %v120, 2
    %v122 = vadd.f32 %v120, %v121
    %v123 = vrot.slane %v122, 1
    %v124 = vadd.f32 %v122, %v123
    %v125 = vsel %vm110, %v82, 0.0
    %v126 = vrot.slane %v125, 4
    %v127 = vadd.f32 %v125, %v126
    %v128 = vrot.slane %v127, 2
    %v129 = vadd.f32 %v127, %v128
    %v130 = vrot.slane %v129, 1
    %v131 = vadd.f32 %v129, %v130
    %v132 = vsel %vm110, %v84, 0.0
    %v133 = vrot.slane %v132, 4
    %v134 = vadd.f32 %v132, %v133
    %v135 = vrot.slane %v134, 2
    %v136 = vadd.f32 %v134, %v135
    %v137 = vrot.slane %v136, 1
    %v138 = vadd.f32 %v136, %v137
    %v139 = vsel %vm110, %v92, 0.0
    %v140 = vrot.slane %v139, 4
    %v141 = vadd.f32 %v139, %v140
    %v142 = vrot.slane %v141, 2
    %v143 = vadd.f32 %v141, %v142
    %v144 = vrot.slane %v143, 1
    %v145 = vadd.f32 %v143, %v144
    %v146 = vsel %vm110, %v100, 0.0
    %v147 = vrot.slane %v146, 4
    %v148 = vadd.f32 %v146, %v147
    %v149 = vrot.slane %v148, 2
    %v150 = vadd.f32 %v148, %v149
    %v151 = vrot.slane %v150, 1
    %v152 = vadd.f32 %v150, %v151
    %v153 = vsel %vm110, %v99, 0.0
    %v154 = vrot.slane %v153, 4
    %v155 = vadd.f32 %v153, %v154
    %v156 = vrot.slane %v155, 2
    %v157 = vadd.f32 %v155, %v156
    %v158 = vrot.slane %v157, 1
    %v159 = vadd.f32 %v157, %v158
    %v160 = vsel %vm110, %v101, 0.0
    %v161 = vrot.slane %v160, 4
    %v162 = vadd.f32 %v160, %v161
    %v163 = vrot.slane %v162, 2
    %v164 = vadd.f32 %v162, %v163
    %v165 = vrot.slane %v164, 1
    %v166 = vadd.f32 %v164, %v165
    %v175 = vcombine.low %v117, %v124
    %v176 = vcombine.low %v131, %v138
    %v178 = vunpack.c.l.s4 1983009808
    %v179 = vunpack.c.0.s8 %v178
    %v180 = vlaneseq
    %v181 = vshrl.u32 %v180, 7
    %v182 = vsub.s32 %v179, %v181
    %v183 = vrot.slane %v175, %v182
    %v185 = vunpack.c.l.s4 1983009808
    %v186 = vunpack.c.0.s8 %v185
    %v187 = vlaneseq
    %v188 = vshrl.u32 %v187, 7
    %v189 = vsub.s32 %v186, %v188
    %v190 = vrot.slane %v176, %v189
    %v191 = vcombine.low %v183, %v190
    %v192 = vcombine.low %v145, %v152
    %v193 = vcombine.low %v159, %v166
    %v195 = vunpack.c.l.s4 1983009808
    %v196 = vunpack.c.0.s8 %v195
    %v197 = vlaneseq
    %v198 = vshrl.u32 %v197, 7
    %v199 = vsub.s32 %v196, %v198
    %v200 = vrot.slane %v192, %v199
    %v202 = vunpack.c.l.s4 1983009808
    %v203 = vunpack.c.0.s8 %v202
    %v204 = vlaneseq
    %v205 = vshrl.u32 %v204, 7
    %v206 = vsub.s32 %v203, %v205
    %v207 = vrot.slane %v193, %v206
    %v208 = vcombine.low %v200, %v207
    %vm209 = vcmask 1044484
    %v210 = vsel %vm209, %v191, %v191
    %vm211 = vcmask 1046534
    %v212 = vsel %vm211, %v191, %v210
    %v213 = vrot.slane %v208, 7
    %vm214 = vcmask 1041409
    %v215 = vsel %vm214, %v213, %v212
    %vm216 = vcmask 1043459
    %v217 = vsel %vm216, %v213, %v215
    %vm218 = vcmask 1045509
    %v219 = vsel %vm218, %v213, %v217
    %vm220 = vcmask 1047559
    %v221 = vsel %vm220, %v213, %v219
    %v223 = vadd.f32 %v63, %v221
    %224 = vst [vmem:[#allocation2] sm:$0xff] %v223
    %v225 = vld [vmem:[#allocation3] sm:$0xff]
    %v226 = vmul.f32 %v59, %v59
    %v227 = vmul.f32 %v60, %v60
    %v228 = vmul.f32 %v61, %v61
    %v229 = vmul.f32 %v62, %v62
    %v230 = vadd.f32 %v226, %v228
    %v231 = vadd.f32 %v227, %v229
    %v234 = vcombine.high %v230, %v230
    %v236 = vunpack.c.l.s4 1983009808
    %v237 = vunpack.c.0.s8 %v236
    %v238 = vlaneseq
    %v239 = vshrl.u32 %v238, 7
    %v240 = vsub.s32 %v237, %v239
    %v241 = vrot.slane %v230, %v240
    %v243 = vunpack.c.l.s4 1983009808
    %v244 = vunpack.c.0.s8 %v243
    %v245 = vlaneseq
    %v246 = vshrl.u32 %v245, 7
    %v247 = vsub.s32 %v244, %v246
    %v248 = vrot.slane %v234, %v247
    %v249 = vcombine.high %v241, %v241
    %v250 = vcombine.high %v248, %v248
    %v251 = vcombine.high %v231, %v231
    %v253 = vunpack.c.l.s4 1983009808
    %v254 = vunpack.c.0.s8 %v253
    %v255 = vlaneseq
    %v256 = vshrl.u32 %v255, 7
    %v257 = vsub.s32 %v254, %v256
    %v258 = vrot.slane %v231, %v257
    %v260 = vunpack.c.l.s4 1983009808
    %v261 = vunpack.c.0.s8 %v260
    %v262 = vlaneseq
    %v263 = vshrl.u32 %v262, 7
    %v264 = vsub.s32 %v261, %v263
    %v265 = vrot.slane %v251, %v264
    %v266 = vcombine.high %v258, %v258
    %v267 = vcombine.high %v265, %v265
    %v276 = vsel %vm110, %v241, 0.0
    %v277 = vrot.slane %v276, 4
    %v278 = vadd.f32 %v276, %v277
    %v279 = vrot.slane %v278, 2
    %v280 = vadd.f32 %v278, %v279
    %v281 = vrot.slane %v280, 1
    %v282 = vadd.f32 %v280, %v281
    %v283 = vsel %vm110, %v249, 0.0
    %v284 = vrot.slane %v283, 4
    %v285 = vadd.f32 %v283, %v284
    %v286 = vrot.slane %v285, 2
    %v287 = vadd.f32 %v285, %v286
    %v288 = vrot.slane %v287, 1
    %v289 = vadd.f32 %v287, %v288
    %v290 = vsel %vm110, %v248, 0.0
    %v291 = vrot.slane %v290, 4
    %v292 = vadd.f32 %v290, %v291
    %v293 = vrot.slane %v292, 2
    %v294 = vadd.f32 %v292, %v293
    %v295 = vrot.slane %v294, 1
    %v296 = vadd.f32 %v294, %v295
    %v297 = vsel %vm110, %v250, 0.0
    %v298 = vrot.slane %v297, 4
    %v299 = vadd.f32 %v297, %v298
    %v300 = vrot.slane %v299, 2
    %v301 = vadd.f32 %v299, %v300
    %v302 = vrot.slane %v301, 1
    %v303 = vadd.f32 %v301, %v302
    %v304 = vsel %vm110, %v258, 0.0
    %v305 = vrot.slane %v304, 4
    %v306 = vadd.f32 %v304, %v305
    %v307 = vrot.slane %v306, 2
    %v308 = vadd.f32 %v306, %v307
    %v309 = vrot.slane %v308, 1
    %v310 = vadd.f32 %v308, %v309
    %v311 = vsel %vm110, %v266, 0.0
    %v312 = vrot.slane %v311, 4
    %v313 = vadd.f32 %v311, %v312
    %v314 = vrot.slane %v313, 2
    %v315 = vadd.f32 %v313, %v314
    %v316 = vrot.slane %v315, 1
    %v317 = vadd.f32 %v315, %v316
    %v318 = vsel %vm110, %v265, 0.0
    %v319 = vrot.slane %v318, 4
    %v320 = vadd.f32 %v318, %v319
    %v321 = vrot.slane %v320, 2
    %v322 = vadd.f32 %v320, %v321
    %v323 = vrot.slane %v322, 1
    %v324 = vadd.f32 %v322, %v323
    %v325 = vsel %vm110, %v267, 0.0
    %v326 = vrot.slane %v325, 4
    %v327 = vadd.f32 %v325, %v326
    %v328 = vrot.slane %v327, 2
    %v329 = vadd.f32 %v327, %v328
    %v330 = vrot.slane %v329, 1
    %v331 = vadd.f32 %v329, %v330
    %v340 = vcombine.low %v282, %v289
    %v341 = vcombine.low %v296, %v303
    %v343 = vunpack.c.l.s4 1983009808
    %v344 = vunpack.c.0.s8 %v343
    %v345 = vlaneseq
    %v346 = vshrl.u32 %v345, 7
    %v347 = vsub.s32 %v344, %v346
    %v348 = vrot.slane %v340, %v347
    %v350 = vunpack.c.l.s4 1983009808
    %v351 = vunpack.c.0.s8 %v350
    %v352 = vlaneseq
    %v353 = vshrl.u32 %v352, 7
    %v354 = vsub.s32 %v351, %v353
    %v355 = vrot.slane %v341, %v354
    %v356 = vcombine.low %v348, %v355
    %v357 = vcombine.low %v310, %v317
    %v358 = vcombine.low %v324, %v331
    %v360 = vunpack.c.l.s4 1983009808
    %v361 = vunpack.c.0.s8 %v360
    %v362 = vlaneseq
    %v363 = vshrl.u32 %v362, 7
    %v364 = vsub.s32 %v361, %v363
    %v365 = vrot.slane %v357, %v364
    %v367 = vunpack.c.l.s4 1983009808
    %v368 = vunpack.c.0.s8 %v367
    %v369 = vlaneseq
    %v370 = vshrl.u32 %v369, 7
    %v371 = vsub.s32 %v368, %v370
    %v372 = vrot.slane %v358, %v371
    %v373 = vcombine.low %v365, %v372
    %v374 = vsel %vm209, %v356, %v356
    %v375 = vsel %vm211, %v356, %v374
    %v376 = vrot.slane %v373, 7
    %v377 = vsel %vm214, %v376, %v375
    %v378 = vsel %vm216, %v376, %v377
    %v379 = vsel %vm218, %v376, %v378
    %v380 = vsel %vm220, %v376, %v379
    %v382 = vadd.f32 %v225, %v380
    %383 = vst [vmem:[#allocation3] sm:$0xff] %v382
    // Predicated region
    $region22: #{tpu_custom_call.1} parent=1 // pred_check
      %p384 = pneg %p53
    $region23: #{tpu_custom_call.1} parent=1 // pred_check_branch
      %386 = sbr.rel (%p384) target = $region25
    $region24: #{tpu_custom_call.1} parent=1 // pred_region
      %v387 = vld [vmem:[#allocation2] sm:$0xff]
      %v389 = vcombine.high %v387, %v387
      %v391 = vunpack.c.l.s4 1983009808
      %v392 = vunpack.c.0.s8 %v391
      %v393 = vlaneseq
      %v394 = vshrl.u32 %v393, 7
      %v395 = vsub.s32 %v392, %v394
      %v396 = vrot.slane %v387, %v395
      %v398 = vunpack.c.l.s4 1983009808
      %v399 = vunpack.c.0.s8 %v398
      %v400 = vlaneseq
      %v401 = vshrl.u32 %v400, 7
      %v402 = vsub.s32 %v399, %v401
      %v403 = vrot.slane %v389, %v402
      %v404 = vcombine.high %v396, %v396
      %v405 = vcombine.high %v403, %v403
      %v410 = vsel %vm110, %v396, 0.0
      %v411 = vsel %vm110, %v404, 0.0
      %v412 = vadd.f32 %v410, %v411
      %v413 = vsel %vm110, %v403, 0.0
      %v414 = vadd.f32 %v412, %v413
      %v415 = vsel %vm110, %v405, 0.0
      %v416 = vadd.f32 %v414, %v415
      %417 = vadd.xlane.f32.xlu0 %v416
      %v418 = vpop.xlane.xlu0 %417
      %vm419 = vcmask 1024
      %420 = vst.msk [vmem:[#allocation9] sm:$0x3] %vm419, %v418
      %v421 = vld [vmem:[#allocation3] sm:$0xff]
      %v423 = vcombine.high %v421, %v421
      %v425 = vunpack.c.l.s4 1983009808
      %v426 = vunpack.c.0.s8 %v425
      %v427 = vlaneseq
      %v428 = vshrl.u32 %v427, 7
      %v429 = vsub.s32 %v426, %v428
      %v430 = vrot.slane %v421, %v429
      %v432 = vunpack.c.l.s4 1983009808
      %v433 = vunpack.c.0.s8 %v432
      %v434 = vlaneseq
      %v435 = vshrl.u32 %v434, 7
      %v436 = vsub.s32 %v433, %v435
      %v437 = vrot.slane %v423, %v436
      %v438 = vcombine.high %v430, %v430
      %v439 = vcombine.high %v437, %v437
      %v444 = vsel %vm110, %v430, 0.0
      %v445 = vsel %vm110, %v438, 0.0
      %v446 = vadd.f32 %v444, %v445
      %v447 = vsel %vm110, %v437, 0.0
      %v448 = vadd.f32 %v446, %v447
      %v449 = vsel %vm110, %v439, 0.0
      %v450 = vadd.f32 %v448, %v449
      %451 = vadd.xlane.f32.xlu0 %v450
      %v452 = vpop.xlane.xlu0 %451
      %453 = vst.msk [vmem:[#allocation10] sm:$0x3] %vm419, %v452
    $region25: #{tpu_custom_call.1} parent=1 // pred_fallthru
      _
    // Predicated region
    $region26: #{tpu_custom_call.1} parent=1 // pred_check
      _
    $region27: #{tpu_custom_call.1} parent=1 // pred_check_branch
      %455 = sbr.rel (0) target = $region29
    $region28: #{tpu_custom_call.1} parent=1 // pred_region
      %s457 = ssub.s32 32, 32
      %458 = vsyncadd [#allocation6], %s457
      %s460 = sshll.u32 [#allocation9], 4
      %s461 = int_to_ptr.vmem [resolvable:$true] %s460
      %463 = dma.vmem_to_hbm [thread:$0]  %s461, 32, %s2, [#allocation6]
    $region29: #{tpu_custom_call.1} parent=1 // pred_fallthru
      _
    // Predicated region
    $region30: #{tpu_custom_call.1} parent=1 // pred_check
      _
    $region31: #{tpu_custom_call.1} parent=1 // pred_check_branch
      %465 = sbr.rel (0) target = $region33
    $region32: #{tpu_custom_call.1} parent=1 // pred_region
      %s467 = ssub.s32 32, 32
      %468 = vsyncadd [#allocation11], %s467
      %s470 = sshll.u32 [#allocation10], 4
      %s471 = int_to_ptr.vmem [resolvable:$true] %s470
      %473 = dma.vmem_to_hbm [thread:$0]  %s471, 32, %s3, [#allocation11]
    $region33: #{tpu_custom_call.1} parent=1 // pred_fallthru
      _
    // Predicated region
    $region34: #{tpu_custom_call.1} parent=1 // pred_check
      _
    $region35: #{tpu_custom_call.1} parent=1 // pred_check_branch
      %475 = sbr.rel (0) target = $region37
    $region36: #{tpu_custom_call.1} parent=1 // pred_region
      %476 = dma.done [#allocation6], 32
    $region37: #{tpu_custom_call.1} parent=1 // pred_fallthru
      _
    // Predicated region
    $region38: #{tpu_custom_call.1} parent=1 // pred_check
      _
    $region39: #{tpu_custom_call.1} parent=1 // pred_check_branch
      %478 = sbr.rel (0) target = $region41
    $region40: #{tpu_custom_call.1} parent=1 // pred_region
      %479 = dma.done [#allocation11], 32
    $region41: #{tpu_custom_call.1} parent=1 // pred_fallthru
      _
    %480 = vsyncpa [#allocation5], 1
    %481 = vsyncpa [#allocation8], 1
    %482 = vsyncpa [#allocation6], 1
    %483 = vsyncpa [#allocation11], 1

</llo_original>
